<compile_context>
chip_gen: v7x
topology: tpu7x:2x2x1
jax: 0.10.0
libtpu: 0.0.40
codegen_flags: <defaults>
</compile_context>

<pallas_src>
import jax
import jax.numpy as jnp
from jax.experimental import pallas as pl
from jax.experimental.pallas import tpu as pltpu

IN_DIM = 28 * 28                 # 784
DIMS = [IN_DIM, 70, 64, 24, 16, 10]
PAD = 128                        # lane-padded width for every hidden / output dim
MAX_TB = 2048                    # batch tile (fits all gens; amortizes ~0.35us/step)


def _mlp_kernel(x_ref,
                w1_ref, b1_ref,
                w2_ref, b2_ref,
                w3_ref, b3_ref,
                w4_ref, b4_ref,
                w5_ref, b5_ref,
                out_ref):
    """One batch tile of the whole MLP.

    x_ref   : (TB, 784)      bf16
    wK_ref  : (in_pad, 128)  bf16  (zero padded)
    bK_ref  : (1, 128)       f32   (zero padded)
    out_ref : (TB, 128)      f32   (softmax probs in lanes [0, 10), zeros after)
    """
    x = x_ref[...]  # bf16, fed straight to the MXU

    # linear1 + relu1   (dropout == identity in eval mode)
    h = jnp.dot(x, w1_ref[...], preferred_element_type=jnp.float32) + b1_ref[...]
    h = jnp.maximum(h, 0.0).astype(jnp.bfloat16)

    # linear2 + relu2
    h = jnp.dot(h, w2_ref[...], preferred_element_type=jnp.float32) + b2_ref[...]
    h = jnp.maximum(h, 0.0).astype(jnp.bfloat16)

    # linear3 + relu3
    h = jnp.dot(h, w3_ref[...], preferred_element_type=jnp.float32) + b3_ref[...]
    h = jnp.maximum(h, 0.0).astype(jnp.bfloat16)

    # linear4 + relu4
    h = jnp.dot(h, w4_ref[...], preferred_element_type=jnp.float32) + b4_ref[...]
    h = jnp.maximum(h, 0.0).astype(jnp.bfloat16)

    # linear5
    logits = jnp.dot(h, w5_ref[...], preferred_element_type=jnp.float32) + b5_ref[...]

    # softmax over the 10 real classes (dim=1); padded lanes masked out.
    lane = jax.lax.broadcasted_iota(jnp.int32, logits.shape, 1)
    valid = lane < DIMS[-1]
    masked = jnp.where(valid, logits, -jnp.inf)
    m = jnp.max(masked, axis=1, keepdims=True)
    e = jnp.where(valid, jnp.exp(masked - m), 0.0)
    s = jnp.sum(e, axis=1, keepdims=True)
    out_ref[...] = e * pl.reciprocal(s, approx=True)


def pad_params(params):
    """Zero-pad weights/biases to 128 lanes and cast weights to bf16.

    Call this ONCE (outside the per-step forward) and reuse the result.
    """
    padded = []
    for li, (w, b) in enumerate(params):
        in_d, out_d = w.shape
        in_pad = IN_DIM if li == 0 else PAD
        wp = (jnp.zeros((in_pad, PAD), jnp.float32)
              .at[:in_d, :out_d].set(w).astype(jnp.bfloat16))
        bp = jnp.zeros((1, PAD), jnp.float32).at[0, :out_d].set(b)
        padded.append((wp, bp))
    return padded


@jax.jit
def custom_mlp_forward(img, padded_params):
    """img: (B, 1, 28, 28) float32 (NCHW). padded_params: output of pad_params.

    Returns (B, 10) softmax probs (float32).
    """
    x = img.reshape(-1, IN_DIM).astype(jnp.bfloat16)          # img.view(-1, 784)
    B = x.shape[0]

    TB = min(MAX_TB, ((B + 7) // 8) * 8)                      # sublane-aligned tile
    B_pad = pl.cdiv(B, TB) * TB
    if B_pad != B:
        x = jnp.pad(x, ((0, B_pad - B), (0, 0)))              # mask tail tile

    flat_args = [x]
    in_specs = [pl.BlockSpec((TB, IN_DIM), lambda i: (i, 0))]
    for wp, bp in padded_params:
        flat_args += [wp, bp]
        in_specs.append(pl.BlockSpec(wp.shape, lambda i: (0, 0)))   # VMEM-resident
        in_specs.append(pl.BlockSpec(bp.shape, lambda i: (0, 0)))

    weight_bytes = sum(wp.size * 2 + bp.size * 4 for wp, bp in padded_params)
    cost = pl.CostEstimate(
        flops=2 * B_pad * (IN_DIM * PAD + 4 * PAD * PAD),
        transcendentals=B_pad * PAD,
        bytes_accessed=B_pad * IN_DIM * 2 + B_pad * PAD * 4 + weight_bytes,
    )

    out_padded = pl.pallas_call(
        _mlp_kernel,
        out_shape=jax.ShapeDtypeStruct((B_pad, PAD), jnp.float32),
        grid=(B_pad // TB,),
        in_specs=in_specs,
        out_specs=pl.BlockSpec((TB, PAD), lambda i: (i, 0)),
        compiler_params=pltpu.CompilerParams(
            dimension_semantics=("parallel",),
            vmem_limit_bytes=32 << 20),
        cost_estimate=cost,
    )(*flat_args)

    return out_padded[:B, :DIMS[-1]]


def init_params(key):
    """Deterministic PyTorch-style init: U(-1/sqrt(fan_in), 1/sqrt(fan_in))."""
    params = []
    for i in range(len(DIMS) - 1):
        fan_in, fan_out = DIMS[i], DIMS[i + 1]
        key, kw, kb = jax.random.split(key, 3)
        bound = 1.0 / (fan_in ** 0.5)
        w = jax.random.uniform(kw, (fan_in, fan_out), jnp.float32, -bound, bound)
        b = jax.random.uniform(kb, (fan_out,), jnp.float32, -bound, bound)
        params.append((w, b))
    return params


def _reference_forward(img, params):
    """Pure-JAX fp32 reference (eval mode)."""
    x = img.reshape(-1, IN_DIM).astype(jnp.float32)
    for i, (w, b) in enumerate(params):
        x = x @ w + b
        if i < len(params) - 1:
            x = jnp.maximum(x, 0.0)
    return jax.nn.softmax(x, axis=1)


if __name__ == "__main__":
    key = jax.random.PRNGKey(0)
    k_params, k_img = jax.random.split(key)

    params = init_params(k_params)
    padded_params = pad_params(params)          # pad/cast once, reuse
    img = jax.random.normal(k_img, (2, 1, 28, 28), jnp.float32)  # NCHW MNIST-like

    out = custom_mlp_forward(img, padded_params)
    out = jax.block_until_ready(out)

    ref = _reference_forward(img, params)
    assert out.shape == (2, 10), out.shape
    # bf16 matmuls + approx reciprocal -> looser tolerance than pure fp32.
    assert jnp.allclose(jnp.sum(out, axis=1), 1.0, atol=1e-2)
    assert jnp.allclose(out, ref, atol=3e-2), float(jnp.max(jnp.abs(out - ref)))

    print("KERNEL_OK")
</pallas_src>

<mosaic_0001>
module attributes {stable_mosaic.version = 11 : i64} {
  func.func @_mlp_kernel(%arg0: i32, %arg1: memref<8x784xbf16, #tpu.memory_space<vmem>>, %arg2: memref<784x128xbf16, #tpu.memory_space<vmem>>, %arg3: memref<1x128xf32, #tpu.memory_space<vmem>>, %arg4: memref<128x128xbf16, #tpu.memory_space<vmem>>, %arg5: memref<1x128xf32, #tpu.memory_space<vmem>>, %arg6: memref<128x128xbf16, #tpu.memory_space<vmem>>, %arg7: memref<1x128xf32, #tpu.memory_space<vmem>>, %arg8: memref<128x128xbf16, #tpu.memory_space<vmem>>, %arg9: memref<1x128xf32, #tpu.memory_space<vmem>>, %arg10: memref<128x128xbf16, #tpu.memory_space<vmem>>, %arg11: memref<1x128xf32, #tpu.memory_space<vmem>>, %arg12: memref<8x128xf32, #tpu.memory_space<vmem>>) attributes {dimension_semantics = [#tpu.dimension_semantics<parallel>], iteration_bounds = array<i64: 1>, scalar_prefetch = 0 : i64, scratch_operands = 0 : i64, tpu.core_type = #tpu.core_type<tc>, window_params = [{transform_indices = @transform_0, window_bounds = array<i64: 8, 784>}, {pipeline_mode = #tpu.pipeline_mode<synchronous>, transform_indices = @transform_1, window_bounds = array<i64: 784, 128>}, {pipeline_mode = #tpu.pipeline_mode<synchronous>, transform_indices = @transform_2, window_bounds = array<i64: 1, 128>}, {pipeline_mode = #tpu.pipeline_mode<synchronous>, transform_indices = @transform_3, window_bounds = array<i64: 128, 128>}, {pipeline_mode = #tpu.pipeline_mode<synchronous>, transform_indices = @transform_4, window_bounds = array<i64: 1, 128>}, {pipeline_mode = #tpu.pipeline_mode<synchronous>, transform_indices = @transform_5, window_bounds = array<i64: 128, 128>}, {pipeline_mode = #tpu.pipeline_mode<synchronous>, transform_indices = @transform_6, window_bounds = array<i64: 1, 128>}, {pipeline_mode = #tpu.pipeline_mode<synchronous>, transform_indices = @transform_7, window_bounds = array<i64: 128, 128>}, {pipeline_mode = #tpu.pipeline_mode<synchronous>, transform_indices = @transform_8, window_bounds = array<i64: 1, 128>}, {pipeline_mode = #tpu.pipeline_mode<synchronous>, transform_indices = @transform_9, window_bounds = array<i64: 128, 128>}, {pipeline_mode = #tpu.pipeline_mode<synchronous>, transform_indices = @transform_10, window_bounds = array<i64: 1, 128>}, {transform_indices = @transform_11, window_bounds = array<i64: 8, 128>}]} {
    %c0 = arith.constant 0 : index
    %c0_0 = arith.constant 0 : index
    %0 = vector.load %arg1[%c0, %c0_0] : memref<8x784xbf16, #tpu.memory_space<vmem>>, vector<8x784xbf16>
    %c0_1 = arith.constant 0 : index
    %c0_2 = arith.constant 0 : index
    %1 = vector.load %arg2[%c0_1, %c0_2] : memref<784x128xbf16, #tpu.memory_space<vmem>>, vector<784x128xbf16>
    %cst = arith.constant dense<0.000000e+00> : vector<8x128xf32>
    %2 = tpu.matmul %0, %1, %cst {dimension_numbers = #tpu.dot_dimension_numbers<[1], [0], [0], [1], [0, 0, 1, 1], [], []>} : vector<8x784xbf16>, vector<784x128xbf16>, vector<8x128xf32> -> vector<8x128xf32>
    %c0_3 = arith.constant 0 : index
    %c0_4 = arith.constant 0 : index
    %3 = vector.load %arg3[%c0_3, %c0_4] : memref<1x128xf32, #tpu.memory_space<vmem>>, vector<1x128xf32>
    %4 = vector.broadcast %3 : vector<1x128xf32> to vector<8x128xf32>
    %5 = arith.addf %2, %4 : vector<8x128xf32>
    %cst_5 = arith.constant 0.000000e+00 : f32
    %6 = vector.broadcast %cst_5 : f32 to vector<8x128xf32>
    %7 = arith.maximumf %5, %6 : vector<8x128xf32>
    %8 = arith.truncf %7 : vector<8x128xf32> to vector<8x128xbf16>
    %c0_6 = arith.constant 0 : index
    %c0_7 = arith.constant 0 : index
    %9 = vector.load %arg4[%c0_6, %c0_7] : memref<128x128xbf16, #tpu.memory_space<vmem>>, vector<128x128xbf16>
    %cst_8 = arith.constant dense<0.000000e+00> : vector<8x128xf32>
    %10 = tpu.matmul %8, %9, %cst_8 {dimension_numbers = #tpu.dot_dimension_numbers<[1], [0], [0], [1], [0, 0, 1, 1], [], []>} : vector<8x128xbf16>, vector<128x128xbf16>, vector<8x128xf32> -> vector<8x128xf32>
    %c0_9 = arith.constant 0 : index
    %c0_10 = arith.constant 0 : index
    %11 = vector.load %arg5[%c0_9, %c0_10] : memref<1x128xf32, #tpu.memory_space<vmem>>, vector<1x128xf32>
    %12 = vector.broadcast %11 : vector<1x128xf32> to vector<8x128xf32>
    %13 = arith.addf %10, %12 : vector<8x128xf32>
    %cst_11 = arith.constant 0.000000e+00 : f32
    %14 = vector.broadcast %cst_11 : f32 to vector<8x128xf32>
    %15 = arith.maximumf %13, %14 : vector<8x128xf32>
    %16 = arith.truncf %15 : vector<8x128xf32> to vector<8x128xbf16>
    %c0_12 = arith.constant 0 : index
    %c0_13 = arith.constant 0 : index
    %17 = vector.load %arg6[%c0_12, %c0_13] : memref<128x128xbf16, #tpu.memory_space<vmem>>, vector<128x128xbf16>
    %cst_14 = arith.constant dense<0.000000e+00> : vector<8x128xf32>
    %18 = tpu.matmul %16, %17, %cst_14 {dimension_numbers = #tpu.dot_dimension_numbers<[1], [0], [0], [1], [0, 0, 1, 1], [], []>} : vector<8x128xbf16>, vector<128x128xbf16>, vector<8x128xf32> -> vector<8x128xf32>
    %c0_15 = arith.constant 0 : index
    %c0_16 = arith.constant 0 : index
    %19 = vector.load %arg7[%c0_15, %c0_16] : memref<1x128xf32, #tpu.memory_space<vmem>>, vector<1x128xf32>
    %20 = vector.broadcast %19 : vector<1x128xf32> to vector<8x128xf32>
    %21 = arith.addf %18, %20 : vector<8x128xf32>
    %cst_17 = arith.constant 0.000000e+00 : f32
    %22 = vector.broadcast %cst_17 : f32 to vector<8x128xf32>
    %23 = arith.maximumf %21, %22 : vector<8x128xf32>
    %24 = arith.truncf %23 : vector<8x128xf32> to vector<8x128xbf16>
    %c0_18 = arith.constant 0 : index
    %c0_19 = arith.constant 0 : index
    %25 = vector.load %arg8[%c0_18, %c0_19] : memref<128x128xbf16, #tpu.memory_space<vmem>>, vector<128x128xbf16>
    %cst_20 = arith.constant dense<0.000000e+00> : vector<8x128xf32>
    %26 = tpu.matmul %24, %25, %cst_20 {dimension_numbers = #tpu.dot_dimension_numbers<[1], [0], [0], [1], [0, 0, 1, 1], [], []>} : vector<8x128xbf16>, vector<128x128xbf16>, vector<8x128xf32> -> vector<8x128xf32>
    %c0_21 = arith.constant 0 : index
    %c0_22 = arith.constant 0 : index
    %27 = vector.load %arg9[%c0_21, %c0_22] : memref<1x128xf32, #tpu.memory_space<vmem>>, vector<1x128xf32>
    %28 = vector.broadcast %27 : vector<1x128xf32> to vector<8x128xf32>
    %29 = arith.addf %26, %28 : vector<8x128xf32>
    %cst_23 = arith.constant 0.000000e+00 : f32
    %30 = vector.broadcast %cst_23 : f32 to vector<8x128xf32>
    %31 = arith.maximumf %29, %30 : vector<8x128xf32>
    %32 = arith.truncf %31 : vector<8x128xf32> to vector<8x128xbf16>
    %c0_24 = arith.constant 0 : index
    %c0_25 = arith.constant 0 : index
    %33 = vector.load %arg10[%c0_24, %c0_25] : memref<128x128xbf16, #tpu.memory_space<vmem>>, vector<128x128xbf16>
    %cst_26 = arith.constant dense<0.000000e+00> : vector<8x128xf32>
    %34 = tpu.matmul %32, %33, %cst_26 {dimension_numbers = #tpu.dot_dimension_numbers<[1], [0], [0], [1], [0, 0, 1, 1], [], []>} : vector<8x128xbf16>, vector<128x128xbf16>, vector<8x128xf32> -> vector<8x128xf32>
    %c0_27 = arith.constant 0 : index
    %c0_28 = arith.constant 0 : index
    %35 = vector.load %arg11[%c0_27, %c0_28] : memref<1x128xf32, #tpu.memory_space<vmem>>, vector<1x128xf32>
    %36 = vector.broadcast %35 : vector<1x128xf32> to vector<8x128xf32>
    %37 = arith.addf %34, %36 : vector<8x128xf32>
    %38 = tpu.iota {dimensions = array<i32: 1>} : vector<8x128xi32>
    %c10_i32 = arith.constant 10 : i32
    %39 = vector.broadcast %c10_i32 : i32 to vector<8x128xi32>
    %40 = arith.cmpi slt, %38, %39 : vector<8x128xi32>
    %cst_29 = arith.constant 0xFF800000 : f32
    %41 = vector.broadcast %cst_29 : f32 to vector<8x128xf32>
    %42 = arith.select %40, %37, %41 : vector<8x128xi1>, vector<8x128xf32>
    %cst_30 = arith.constant dense<0xFF800000> : vector<8xf32>
    %43 = vector.multi_reduction <maximumf>, %42, %cst_30 [1] : vector<8x128xf32> to vector<8xf32>
    %44 = vector.shape_cast %43 : vector<8xf32> to vector<8x1xf32>
    %45 = vector.broadcast %44 : vector<8x1xf32> to vector<8x128xf32>
    %46 = arith.subf %42, %45 : vector<8x128xf32>
    %47 = math.exp %46 : vector<8x128xf32>
    %cst_31 = arith.constant 0.000000e+00 : f32
    %48 = vector.broadcast %cst_31 : f32 to vector<8x128xf32>
    %49 = arith.select %40, %47, %48 : vector<8x128xi1>, vector<8x128xf32>
    %cst_32 = arith.constant dense<0.000000e+00> : vector<8xf32>
    %50 = vector.multi_reduction <add>, %49, %cst_32 [1] : vector<8x128xf32> to vector<8xf32>
    %51 = vector.shape_cast %50 : vector<8xf32> to vector<8x1xf32>
    %52 = tpu.reciprocal %51 {approx = true} : vector<8x1xf32> -> vector<8x1xf32>
    %53 = vector.broadcast %52 : vector<8x1xf32> to vector<8x128xf32>
    %54 = arith.mulf %49, %53 : vector<8x128xf32>
    %c0_33 = arith.constant 0 : index
    %c0_34 = arith.constant 0 : index
    %55 = vector.load %arg12[%c0_33, %c0_34] : memref<8x128xf32, #tpu.memory_space<vmem>>, vector<8x128xf32>
    tpu.vector_store %arg12[%c0_33, %c0_34], %54 {strides = array<i32>} : memref<8x128xf32, #tpu.memory_space<vmem>>, vector<8x128xf32>,
    return
  }
  func.func @transform_0(%arg0: i32) -> (i32, i32) {
    %c0_i32 = arith.constant 0 : i32
    %c0_i32_0 = arith.constant 0 : i32
    return %arg0, %c0_i32 : i32, i32
  }
  func.func @transform_1(%arg0: i32) -> (i32, i32) {
    %c0_i32 = arith.constant 0 : i32
    %c0_i32_0 = arith.constant 0 : i32
    %c0_i32_1 = arith.constant 0 : i32
    return %c0_i32, %c0_i32_0 : i32, i32
  }
  func.func @transform_2(%arg0: i32) -> (i32, i32) {
    %c0_i32 = arith.constant 0 : i32
    %c0_i32_0 = arith.constant 0 : i32
    %c0_i32_1 = arith.constant 0 : i32
    return %c0_i32, %c0_i32_0 : i32, i32
  }
  func.func @transform_3(%arg0: i32) -> (i32, i32) {
    %c0_i32 = arith.constant 0 : i32
    %c0_i32_0 = arith.constant 0 : i32
    %c0_i32_1 = arith.constant 0 : i32
    return %c0_i32, %c0_i32_0 : i32, i32
  }
  func.func @transform_4(%arg0: i32) -> (i32, i32) {
    %c0_i32 = arith.constant 0 : i32
    %c0_i32_0 = arith.constant 0 : i32
    %c0_i32_1 = arith.constant 0 : i32
    return %c0_i32, %c0_i32_0 : i32, i32
  }
  func.func @transform_5(%arg0: i32) -> (i32, i32) {
    %c0_i32 = arith.constant 0 : i32
    %c0_i32_0 = arith.constant 0 : i32
    %c0_i32_1 = arith.constant 0 : i32
    return %c0_i32, %c0_i32_0 : i32, i32
  }
  func.func @transform_6(%arg0: i32) -> (i32, i32) {
    %c0_i32 = arith.constant 0 : i32
    %c0_i32_0 = arith.constant 0 : i32
    %c0_i32_1 = arith.constant 0 : i32
    return %c0_i32, %c0_i32_0 : i32, i32
  }
  func.func @transform_7(%arg0: i32) -> (i32, i32) {
    %c0_i32 = arith.constant 0 : i32
    %c0_i32_0 = arith.constant 0 : i32
    %c0_i32_1 = arith.constant 0 : i32
    return %c0_i32, %c0_i32_0 : i32, i32
  }
  func.func @transform_8(%arg0: i32) -> (i32, i32) {
    %c0_i32 = arith.constant 0 : i32
    %c0_i32_0 = arith.constant 0 : i32
    %c0_i32_1 = arith.constant 0 : i32
    return %c0_i32, %c0_i32_0 : i32, i32
  }
  func.func @transform_9(%arg0: i32) -> (i32, i32) {
    %c0_i32 = arith.constant 0 : i32
    %c0_i32_0 = arith.constant 0 : i32
    %c0_i32_1 = arith.constant 0 : i32
    return %c0_i32, %c0_i32_0 : i32, i32
  }
  func.func @transform_10(%arg0: i32) -> (i32, i32) {
    %c0_i32 = arith.constant 0 : i32
    %c0_i32_0 = arith.constant 0 : i32
    %c0_i32_1 = arith.constant 0 : i32
    return %c0_i32, %c0_i32_0 : i32, i32
  }
  func.func @transform_11(%arg0: i32) -> (i32, i32) {
    %c0_i32 = arith.constant 0 : i32
    %c0_i32_0 = arith.constant 0 : i32
    return %arg0, %c0_i32 : i32, i32
  }
}

</mosaic_0001>

<llo_original>
// kernel: custom_mlp_forward.1
$region0: #{custom_mlp_forward.1}
  #allocation0 [shape = 'u32[]', space=smem, size = 0x4, offset = 0x4, fixed_abs, tag = 'smem constant byte address 0x4 - core index']
  #allocation1 [shape = 'u32[144,128]{1,0:T(1,128)}', space=vmem, size = 0x12000, scoped, tag = 'internal scratch']
  %s0 = inlined_call_operand.vmem [shape: bf16[8,784], index: 0, kind: input, shape index: {}]
  %s1 = inlined_call_operand.hbm [shape: bf16[784,128], index: 1, kind: input, shape index: {}]
  %s2 = inlined_call_operand.vmem [shape: f32[1,128], index: 2, kind: input, shape index: {}]
  %s3 = inlined_call_operand.vmem [shape: bf16[128,128], index: 3, kind: input, shape index: {}]
  %s4 = inlined_call_operand.hbm [shape: f32[1,128], index: 4, kind: input, shape index: {}]
  %s5 = inlined_call_operand.vmem [shape: bf16[128,128], index: 5, kind: input, shape index: {}]
  %s6 = inlined_call_operand.hbm [shape: f32[1,128], index: 6, kind: input, shape index: {}]
  %s7 = inlined_call_operand.hbm [shape: bf16[128,128], index: 7, kind: input, shape index: {}]
  %s8 = inlined_call_operand.hbm [shape: f32[1,128], index: 8, kind: input, shape index: {}]
  %s9 = inlined_call_operand.vmem [shape: bf16[128,128], index: 9, kind: input, shape index: {}]
  %s10 = inlined_call_operand.vmem [shape: f32[1,128], index: 10, kind: input, shape index: {}]
  %s11 = inlined_call_operand.vmem [shape: f32[8,128], index: 11, kind: output, shape index: {}]
  %s12 = sld [smem:[#allocation0]]
  $region74: #{custom_mlp_forward.1} parent=0
    _
  %s14 = ssub.s32 1, %s12
  %s15 = scalar_select 0, %s14, %s12
  $region1: #{custom_mlp_forward.1} parent=0
    #allocation2 [shape = 'u8[200704]{0}', space=vmem, size = 0x31000, scoped, tag = 'input window, operand 1, single buffered']
    #allocation3 [shape = 's32[1]{0}', space=sflag, size = 0x4, scoped, tag = 'scoped memory for custom_mlp_forward.1']
    #allocation4 [shape = 'u8[512]{0}', space=vmem, size = 0x400, scoped, tag = 'input window, operand 4, single buffered']
    #allocation5 [shape = 's32[1]{0}', space=sflag, size = 0x4, scoped, tag = 'scoped memory for custom_mlp_forward.1']
    #allocation6 [shape = 'u8[512]{0}', space=vmem, size = 0x400, scoped, tag = 'input window, operand 6, single buffered']
    #allocation7 [shape = 'u8[32768]{0}', space=vmem, size = 0x8000, scoped, tag = 'input window, operand 7, single buffered']
    #allocation8 [shape = 's32[1]{0}', space=sflag, size = 0x4, scoped, tag = 'scoped memory for custom_mlp_forward.1']
    #allocation9 [shape = 'u8[512]{0}', space=vmem, size = 0x400, scoped, tag = 'input window, operand 8, single buffered']
    %16 = vsyncpa [#allocation3], 0
    %17 = vsyncpa [#allocation5], 0
    %18 = vsyncpa [#allocation8], 0
    // Predicated region
    $region2: #{custom_mlp_forward.1} parent=1 // pred_check
      _
    $region3: #{custom_mlp_forward.1} parent=1 // pred_check_branch
      %20 = sbr.rel (0) target = $region5
    $region4: #{custom_mlp_forward.1} parent=1 // pred_region
      _
    $region5: #{custom_mlp_forward.1} parent=1 // pred_fallthru
      _
    // Predicated region
    $region6: #{custom_mlp_forward.1} parent=1 // pred_check
      _
    $region7: #{custom_mlp_forward.1} parent=1 // pred_check_branch
      %22 = sbr.rel (0) target = $region9
    $region8: #{custom_mlp_forward.1} parent=1 // pred_region
      %s24 = ssub.s32 6272, 6272
      %25 = vsyncadd [#allocation3], %s24
      %s26 = sshll.u32 [#allocation2], 4
      %s27 = int_to_ptr.vmem [resolvable:$true] %s26
      %32 = dma.hbm_to_vmem [thread:$0]  %s1, 6272, %s27, [#allocation3], 64, 64, 4
    $region9: #{custom_mlp_forward.1} parent=1 // pred_fallthru
      _
    // Predicated region
    $region10: #{custom_mlp_forward.1} parent=1 // pred_check
      _
    $region11: #{custom_mlp_forward.1} parent=1 // pred_check_branch
      %34 = sbr.rel (0) target = $region13
    $region12: #{custom_mlp_forward.1} parent=1 // pred_region
      _
    $region13: #{custom_mlp_forward.1} parent=1 // pred_fallthru
      _
    // Predicated region
    $region14: #{custom_mlp_forward.1} parent=1 // pred_check
      _
    $region15: #{custom_mlp_forward.1} parent=1 // pred_check_branch
      %36 = sbr.rel (0) target = $region17
    $region16: #{custom_mlp_forward.1} parent=1 // pred_region
      _
    $region17: #{custom_mlp_forward.1} parent=1 // pred_fallthru
      _
    // Predicated region
    $region18: #{custom_mlp_forward.1} parent=1 // pred_check
      _
    $region19: #{custom_mlp_forward.1} parent=1 // pred_check_branch
      %38 = sbr.rel (0) target = $region21
    $region20: #{custom_mlp_forward.1} parent=1 // pred_region
      %s40 = ssub.s32 16, 16
      %41 = vsyncadd [#allocation5], %s40
      %s43 = sshll.u32 [#allocation4], 4
      %s44 = int_to_ptr.vmem [resolvable:$true] %s43
      %46 = dma.hbm_to_vmem [thread:$0]  %s4, 16, %s44, [#allocation5]
    $region21: #{custom_mlp_forward.1} parent=1 // pred_fallthru
      _
    // Predicated region
    $region22: #{custom_mlp_forward.1} parent=1 // pred_check
      _
    $region23: #{custom_mlp_forward.1} parent=1 // pred_check_branch
      %48 = sbr.rel (0) target = $region25
    $region24: #{custom_mlp_forward.1} parent=1 // pred_region
      _
    $region25: #{custom_mlp_forward.1} parent=1 // pred_fallthru
      _
    // Predicated region
    $region26: #{custom_mlp_forward.1} parent=1 // pred_check
      _
    $region27: #{custom_mlp_forward.1} parent=1 // pred_check_branch
      %50 = sbr.rel (0) target = $region29
    $region28: #{custom_mlp_forward.1} parent=1 // pred_region
      %s52 = ssub.s32 16, 16
      %53 = vsyncadd [#allocation5], %s52
      %s55 = sshll.u32 [#allocation6], 4
      %s56 = int_to_ptr.vmem [resolvable:$true] %s55
      %58 = dma.hbm_to_vmem [thread:$0]  %s6, 16, %s56, [#allocation5]
    $region29: #{custom_mlp_forward.1} parent=1 // pred_fallthru
      _
    // Predicated region
    $region30: #{custom_mlp_forward.1} parent=1 // pred_check
      _
    $region31: #{custom_mlp_forward.1} parent=1 // pred_check_branch
      %60 = sbr.rel (0) target = $region33
    $region32: #{custom_mlp_forward.1} parent=1 // pred_region
      %s62 = ssub.s32 1024, 1024
      %63 = vsyncadd [#allocation8], %s62
      %s64 = sshll.u32 [#allocation7], 4
      %s65 = int_to_ptr.vmem [resolvable:$true] %s64
      %70 = dma.hbm_to_vmem [thread:$0]  %s7, 1024, %s65, [#allocation8], 64, 64, 4
    $region33: #{custom_mlp_forward.1} parent=1 // pred_fallthru
      _
    // Predicated region
    $region34: #{custom_mlp_forward.1} parent=1 // pred_check
      _
    $region35: #{custom_mlp_forward.1} parent=1 // pred_check_branch
      %72 = sbr.rel (0) target = $region37
    $region36: #{custom_mlp_forward.1} parent=1 // pred_region
      %s74 = ssub.s32 16, 16
      %75 = vsyncadd [#allocation8], %s74
      %s77 = sshll.u32 [#allocation9], 4
      %s78 = int_to_ptr.vmem [resolvable:$true] %s77
      %80 = dma.hbm_to_vmem [thread:$0]  %s8, 16, %s78, [#allocation8]
    $region37: #{custom_mlp_forward.1} parent=1 // pred_fallthru
      _
    // Predicated region
    $region38: #{custom_mlp_forward.1} parent=1 // pred_check
      _
    $region39: #{custom_mlp_forward.1} parent=1 // pred_check_branch
      %82 = sbr.rel (0) target = $region41
    $region40: #{custom_mlp_forward.1} parent=1 // pred_region
      _
    $region41: #{custom_mlp_forward.1} parent=1 // pred_fallthru
      _
    // Predicated region
    $region42: #{custom_mlp_forward.1} parent=1 // pred_check
      _
    $region43: #{custom_mlp_forward.1} parent=1 // pred_check_branch
      %84 = sbr.rel (0) target = $region45
    $region44: #{custom_mlp_forward.1} parent=1 // pred_region
      _
    $region45: #{custom_mlp_forward.1} parent=1 // pred_fallthru
      _
    // Predicated region
    $region46: #{custom_mlp_forward.1} parent=1 // pred_check
      _
    $region47: #{custom_mlp_forward.1} parent=1 // pred_check_branch
      %86 = sbr.rel (0) target = $region49
    $region48: #{custom_mlp_forward.1} parent=1 // pred_region
      %87 = dma.done [#allocation3], 6272
    $region49: #{custom_mlp_forward.1} parent=1 // pred_fallthru
      _
    // Predicated region
    $region50: #{custom_mlp_forward.1} parent=1 // pred_check
      _
    $region51: #{custom_mlp_forward.1} parent=1 // pred_check_branch
      %89 = sbr.rel (0) target = $region53
    $region52: #{custom_mlp_forward.1} parent=1 // pred_region
      %90 = dma.done [#allocation5], 16
    $region53: #{custom_mlp_forward.1} parent=1 // pred_fallthru
      _
    // Predicated region
    $region54: #{custom_mlp_forward.1} parent=1 // pred_check
      _
    $region55: #{custom_mlp_forward.1} parent=1 // pred_check_branch
      %92 = sbr.rel (0) target = $region57
    $region56: #{custom_mlp_forward.1} parent=1 // pred_region
      %93 = dma.done [#allocation5], 16
    $region57: #{custom_mlp_forward.1} parent=1 // pred_fallthru
      _
    // Predicated region
    $region58: #{custom_mlp_forward.1} parent=1 // pred_check
      _
    $region59: #{custom_mlp_forward.1} parent=1 // pred_check_branch
      %95 = sbr.rel (0) target = $region61
    $region60: #{custom_mlp_forward.1} parent=1 // pred_region
      %96 = dma.done [#allocation8], 1024
    $region61: #{custom_mlp_forward.1} parent=1 // pred_fallthru
      _
    // Predicated region
    $region62: #{custom_mlp_forward.1} parent=1 // pred_check
      _
    $region63: #{custom_mlp_forward.1} parent=1 // pred_check_branch
      %98 = sbr.rel (0) target = $region65
    $region64: #{custom_mlp_forward.1} parent=1 // pred_region
      %99 = dma.done [#allocation8], 16
    $region65: #{custom_mlp_forward.1} parent=1 // pred_fallthru
      _
    %v101 = vld [vmem:[%s0] sm:$0xff]
    %v102 = vld [vmem:[%s0 + $0x8] sm:$0xff]
    %v103 = vld [vmem:[%s0 + $0x10] sm:$0xff]
    %v104 = vld [vmem:[%s0 + $0x18] sm:$0xf]
    %v105 = vld [vmem:[#allocation2] sm:$0xf]
    %v106 = vld [vmem:[#allocation2 + $0x4] sm:$0xf]
    %v107 = vld [vmem:[#allocation2 + $0x8] sm:$0xf]
    %v108 = vld [vmem:[#allocation2 + $0xc] sm:$0xf]
    %v109 = vld [vmem:[#allocation2 + $0x10] sm:$0xf]
    %v110 = vld [vmem:[#allocation2 + $0x14] sm:$0xf]
    %v111 = vld [vmem:[#allocation2 + $0x18] sm:$0xf]
    %v112 = vld [vmem:[#allocation2 + $0x1c] sm:$0xf]
    %v113 = vld [vmem:[#allocation2 + $0x20] sm:$0xf]
    %v114 = vld [vmem:[#allocation2 + $0x24] sm:$0xf]
    %v115 = vld [vmem:[#allocation2 + $0x28] sm:$0xf]
    %v116 = vld [vmem:[#allocation2 + $0x2c] sm:$0xf]
    %v117 = vld [vmem:[#allocation2 + $0x30] sm:$0xf]
    %v118 = vld [vmem:[#allocation2 + $0x34] sm:$0xf]
    %v119 = vld [vmem:[#allocation2 + $0x38] sm:$0xf]
    %v120 = vld [vmem:[#allocation2 + $0x3c] sm:$0xf]
    %v121 = vld [vmem:[#allocation2 + $0x40] sm:$0xf]
    %v122 = vld [vmem:[#allocation2 + $0x44] sm:$0xf]
    %v123 = vld [vmem:[#allocation2 + $0x48] sm:$0xf]
    %v124 = vld [vmem:[#allocation2 + $0x4c] sm:$0xf]
    %v125 = vld [vmem:[#allocation2 + $0x50] sm:$0xf]
    %v126 = vld [vmem:[#allocation2 + $0x54] sm:$0xf]
    %v127 = vld [vmem:[#allocation2 + $0x58] sm:$0xf]
    %v128 = vld [vmem:[#allocation2 + $0x5c] sm:$0xf]
    %v129 = vld [vmem:[#allocation2 + $0x60] sm:$0xf]
    %v130 = vld [vmem:[#allocation2 + $0x64] sm:$0xf]
    %v131 = vld [vmem:[#allocation2 + $0x68] sm:$0xf]
    %v132 = vld [vmem:[#allocation2 + $0x6c] sm:$0xf]
    %v133 = vld [vmem:[#allocation2 + $0x70] sm:$0xf]
    %v134 = vld [vmem:[#allocation2 + $0x74] sm:$0xf]
    %v135 = vld [vmem:[#allocation2 + $0x78] sm:$0xf]
    %v136 = vld [vmem:[#allocation2 + $0x7c] sm:$0xf]
    %v137 = vld [vmem:[#allocation2 + $0x80] sm:$0xf]
    %v138 = vld [vmem:[#allocation2 + $0x84] sm:$0xf]
    %v139 = vld [vmem:[#allocation2 + $0x88] sm:$0xf]
    %v140 = vld [vmem:[#allocation2 + $0x8c] sm:$0xf]
    %v141 = vld [vmem:[#allocation2 + $0x90] sm:$0xf]
    %v142 = vld [vmem:[#allocation2 + $0x94] sm:$0xf]
    %v143 = vld [vmem:[#allocation2 + $0x98] sm:$0xf]
    %v144 = vld [vmem:[#allocation2 + $0x9c] sm:$0xf]
    %v145 = vld [vmem:[#allocation2 + $0xa0] sm:$0xf]
    %v146 = vld [vmem:[#allocation2 + $0xa4] sm:$0xf]
    %v147 = vld [vmem:[#allocation2 + $0xa8] sm:$0xf]
    %v148 = vld [vmem:[#allocation2 + $0xac] sm:$0xf]
    %v149 = vld [vmem:[#allocation2 + $0xb0] sm:$0xf]
    %v150 = vld [vmem:[#allocation2 + $0xb4] sm:$0xf]
    %v151 = vld [vmem:[#allocation2 + $0xb8] sm:$0xf]
    %v152 = vld [vmem:[#allocation2 + $0xbc] sm:$0xf]
    %v153 = vld [vmem:[#allocation2 + $0xc0] sm:$0xf]
    %v154 = vld [vmem:[#allocation2 + $0xc4] sm:$0xf]
    %v155 = vld [vmem:[#allocation2 + $0xc8] sm:$0xf]
    %v156 = vld [vmem:[#allocation2 + $0xcc] sm:$0xf]
    %v157 = vld [vmem:[#allocation2 + $0xd0] sm:$0xf]
    %v158 = vld [vmem:[#allocation2 + $0xd4] sm:$0xf]
    %v159 = vld [vmem:[#allocation2 + $0xd8] sm:$0xf]
    %v160 = vld [vmem:[#allocation2 + $0xdc] sm:$0xf]
    %v161 = vld [vmem:[#allocation2 + $0xe0] sm:$0xf]
    %v162 = vld [vmem:[#allocation2 + $0xe4] sm:$0xf]
    %v163 = vld [vmem:[#allocation2 + $0xe8] sm:$0xf]
    %v164 = vld [vmem:[#allocation2 + $0xec] sm:$0xf]
    %v165 = vld [vmem:[#allocation2 + $0xf0] sm:$0xf]
    %v166 = vld [vmem:[#allocation2 + $0xf4] sm:$0xf]
    %v167 = vld [vmem:[#allocation2 + $0xf8] sm:$0xf]
    %v168 = vld [vmem:[#allocation2 + $0xfc] sm:$0xf]
    %v169 = vld [vmem:[#allocation2 + $0x100] sm:$0xf]
    %v170 = vld [vmem:[#allocation2 + $0x104] sm:$0xf]
    %v171 = vld [vmem:[#allocation2 + $0x108] sm:$0xf]
    %v172 = vld [vmem:[#allocation2 + $0x10c] sm:$0xf]
    %v173 = vld [vmem:[#allocation2 + $0x110] sm:$0xf]
    %v174 = vld [vmem:[#allocation2 + $0x114] sm:$0xf]
    %v175 = vld [vmem:[#allocation2 + $0x118] sm:$0xf]
    %v176 = vld [vmem:[#allocation2 + $0x11c] sm:$0xf]
    %v177 = vld [vmem:[#allocation2 + $0x120] sm:$0xf]
    %v178 = vld [vmem:[#allocation2 + $0x124] sm:$0xf]
    %v179 = vld [vmem:[#allocation2 + $0x128] sm:$0xf]
    %v180 = vld [vmem:[#allocation2 + $0x12c] sm:$0xf]
    %v181 = vld [vmem:[#allocation2 + $0x130] sm:$0xf]
    %v182 = vld [vmem:[#allocation2 + $0x134] sm:$0xf]
    %v183 = vld [vmem:[#allocation2 + $0x138] sm:$0xf]
    %v184 = vld [vmem:[#allocation2 + $0x13c] sm:$0xf]
    %v185 = vld [vmem:[#allocation2 + $0x140] sm:$0xf]
    %v186 = vld [vmem:[#allocation2 + $0x144] sm:$0xf]
    %v187 = vld [vmem:[#allocation2 + $0x148] sm:$0xf]
    %v188 = vld [vmem:[#allocation2 + $0x14c] sm:$0xf]
    %v189 = vld [vmem:[#allocation2 + $0x150] sm:$0xf]
    %v190 = vld [vmem:[#allocation2 + $0x154] sm:$0xf]
    %v191 = vld [vmem:[#allocation2 + $0x158] sm:$0xf]
    %v192 = vld [vmem:[#allocation2 + $0x15c] sm:$0xf]
    %v193 = vld [vmem:[#allocation2 + $0x160] sm:$0xf]
    %v194 = vld [vmem:[#allocation2 + $0x164] sm:$0xf]
    %v195 = vld [vmem:[#allocation2 + $0x168] sm:$0xf]
    %v196 = vld [vmem:[#allocation2 + $0x16c] sm:$0xf]
    %v197 = vld [vmem:[#allocation2 + $0x170] sm:$0xf]
    %v198 = vld [vmem:[#allocation2 + $0x174] sm:$0xf]
    %v199 = vld [vmem:[#allocation2 + $0x178] sm:$0xf]
    %v200 = vld [vmem:[#allocation2 + $0x17c] sm:$0xf]
    %v201 = vld [vmem:[#allocation2 + $0x180] sm:$0xf]
    %v202 = vld [vmem:[#allocation2 + $0x184] sm:$0xf]
    %v203 = vld [vmem:[%s2] sm:$0x1]
    %v205 = vlaneseq
    %v206 = vshrl.u32 %v205, 7
    %v207 = vsub.s32 0, %v206
    %v208 = vrot.slane %v203, %v207
    %v214 = vunpack.c.l.b16 %v101
    %v215 = vunpack.c.h.b16 %v101
    %v216 = vunpack.c.l.b16 %v102
    %v217 = vunpack.c.h.b16 %v102
    %v218 = vunpack.c.l.b16 %v103
    %v219 = vunpack.c.h.b16 %v103
    %v220 = vunpack.c.l.b16 %v104
    %v221 = vpack.c.b16 %v214, %v214
    %v222 = vpack.c.b16 %v215, %v215
    %v223 = vpack.c.b16 %v216, %v216
    %v224 = vpack.c.b16 %v217, %v217
    %v225 = vpack.c.b16 %v218, %v218
    %v226 = vpack.c.b16 %v219, %v219
    %v227 = vpack.c.b16 %v220, %v220
    %v332 = vunpack.c.l.b16 %v105
    %v333 = vunpack.c.l.b16 %v106
    %v334 = vunpack.c.l.b16 %v107
    %v335 = vunpack.c.l.b16 %v108
    %v336 = vunpack.c.l.b16 %v109
    %v337 = vunpack.c.l.b16 %v110
    %v338 = vunpack.c.l.b16 %v111
    %v339 = vunpack.c.l.b16 %v112
    %v340 = vunpack.c.l.b16 %v113
    %v341 = vunpack.c.l.b16 %v114
    %v342 = vunpack.c.l.b16 %v115
    %v343 = vunpack.c.l.b16 %v116
    %v344 = vunpack.c.l.b16 %v117
    %v345 = vunpack.c.l.b16 %v118
    %v346 = vunpack.c.l.b16 %v119
    %v347 = vunpack.c.l.b16 %v120
    %v348 = vunpack.c.l.b16 %v121
    %v349 = vunpack.c.l.b16 %v122
    %v350 = vunpack.c.l.b16 %v123
    %v351 = vunpack.c.l.b16 %v124
    %v352 = vunpack.c.l.b16 %v125
    %v353 = vunpack.c.l.b16 %v126
    %v354 = vunpack.c.l.b16 %v127
    %v355 = vunpack.c.l.b16 %v128
    %v356 = vunpack.c.l.b16 %v129
    %v357 = vunpack.c.l.b16 %v130
    %v358 = vunpack.c.l.b16 %v131
    %v359 = vunpack.c.l.b16 %v132
    %v360 = vunpack.c.l.b16 %v133
    %v361 = vunpack.c.l.b16 %v134
    %v362 = vunpack.c.l.b16 %v135
    %v363 = vunpack.c.l.b16 %v136
    %v364 = vunpack.c.l.b16 %v137
    %v365 = vunpack.c.l.b16 %v138
    %v366 = vunpack.c.l.b16 %v139
    %v367 = vunpack.c.l.b16 %v140
    %v368 = vunpack.c.l.b16 %v141
    %v369 = vunpack.c.l.b16 %v142
    %v370 = vunpack.c.l.b16 %v143
    %v371 = vunpack.c.l.b16 %v144
    %v372 = vunpack.c.l.b16 %v145
    %v373 = vunpack.c.l.b16 %v146
    %v374 = vunpack.c.l.b16 %v147
    %v375 = vunpack.c.l.b16 %v148
    %v376 = vunpack.c.l.b16 %v149
    %v377 = vunpack.c.l.b16 %v150
    %v378 = vunpack.c.l.b16 %v151
    %v379 = vunpack.c.l.b16 %v152
    %v380 = vunpack.c.l.b16 %v153
    %v381 = vunpack.c.l.b16 %v154
    %v382 = vunpack.c.l.b16 %v155
    %v383 = vunpack.c.l.b16 %v156
    %v384 = vunpack.c.l.b16 %v157
    %v385 = vunpack.c.l.b16 %v158
    %v386 = vunpack.c.l.b16 %v159
    %v387 = vunpack.c.l.b16 %v160
    %v388 = vunpack.c.l.b16 %v161
    %v389 = vunpack.c.l.b16 %v162
    %v390 = vunpack.c.l.b16 %v163
    %v391 = vunpack.c.l.b16 %v164
    %v392 = vunpack.c.l.b16 %v165
    %v393 = vunpack.c.l.b16 %v166
    %v394 = vunpack.c.l.b16 %v167
    %v395 = vunpack.c.l.b16 %v168
    %v396 = vunpack.c.l.b16 %v169
    %v397 = vunpack.c.l.b16 %v170
    %v398 = vunpack.c.l.b16 %v171
    %v399 = vunpack.c.l.b16 %v172
    %v400 = vunpack.c.l.b16 %v173
    %v401 = vunpack.c.l.b16 %v174
    %v402 = vunpack.c.l.b16 %v175
    %v403 = vunpack.c.l.b16 %v176
    %v404 = vunpack.c.l.b16 %v177
    %v405 = vunpack.c.l.b16 %v178
    %v406 = vunpack.c.l.b16 %v179
    %v407 = vunpack.c.l.b16 %v180
    %v408 = vunpack.c.l.b16 %v181
    %v409 = vunpack.c.l.b16 %v182
    %v410 = vunpack.c.l.b16 %v183
    %v411 = vunpack.c.l.b16 %v184
    %v412 = vunpack.c.l.b16 %v185
    %v413 = vunpack.c.l.b16 %v186
    %v414 = vunpack.c.l.b16 %v187
    %v415 = vunpack.c.l.b16 %v188
    %v416 = vunpack.c.l.b16 %v189
    %v417 = vunpack.c.l.b16 %v190
    %v418 = vunpack.c.l.b16 %v191
    %v419 = vunpack.c.l.b16 %v192
    %v420 = vunpack.c.l.b16 %v193
    %v421 = vunpack.c.l.b16 %v194
    %v422 = vunpack.c.l.b16 %v195
    %v423 = vunpack.c.l.b16 %v196
    %v424 = vunpack.c.l.b16 %v197
    %v425 = vunpack.c.l.b16 %v198
    %v426 = vunpack.c.l.b16 %v199
    %v427 = vunpack.c.l.b16 %v200
    %v428 = vunpack.c.l.b16 %v201
    %v429 = vunpack.c.l.b16 %v202
    %v430 = vpack.c.b16 %v333, %v332
    %v431 = vpack.c.b16 %v335, %v334
    %v432 = vpack.c.b16 %v337, %v336
    %v433 = vpack.c.b16 %v339, %v338
    %v434 = vpack.c.b16 %v341, %v340
    %v435 = vpack.c.b16 %v343, %v342
    %v436 = vpack.c.b16 %v345, %v344
    %v437 = vpack.c.b16 %v347, %v346
    %v438 = vpack.c.b16 %v349, %v348
    %v439 = vpack.c.b16 %v351, %v350
    %v440 = vpack.c.b16 %v353, %v352
    %v441 = vpack.c.b16 %v355, %v354
    %v442 = vpack.c.b16 %v357, %v356
    %v443 = vpack.c.b16 %v359, %v358
    %v444 = vpack.c.b16 %v361, %v360
    %v445 = vpack.c.b16 %v363, %v362
    %v446 = vpack.c.b16 %v365, %v364
    %v447 = vpack.c.b16 %v367, %v366
    %v448 = vpack.c.b16 %v369, %v368
    %v449 = vpack.c.b16 %v371, %v370
    %v450 = vpack.c.b16 %v373, %v372
    %v451 = vpack.c.b16 %v375, %v374
    %v452 = vpack.c.b16 %v377, %v376
    %v453 = vpack.c.b16 %v379, %v378
    %v454 = vpack.c.b16 %v381, %v380
    %v455 = vpack.c.b16 %v383, %v382
    %v456 = vpack.c.b16 %v385, %v384
    %v457 = vpack.c.b16 %v387, %v386
    %v458 = vpack.c.b16 %v389, %v388
    %v459 = vpack.c.b16 %v391, %v390
    %v460 = vpack.c.b16 %v393, %v392
    %v461 = vpack.c.b16 %v395, %v394
    %v462 = vpack.c.b16 %v397, %v396
    %v463 = vpack.c.b16 %v399, %v398
    %v464 = vpack.c.b16 %v401, %v400
    %v465 = vpack.c.b16 %v403, %v402
    %v466 = vpack.c.b16 %v405, %v404
    %v467 = vpack.c.b16 %v407, %v406
    %v468 = vpack.c.b16 %v409, %v408
    %v469 = vpack.c.b16 %v411, %v410
    %v470 = vpack.c.b16 %v413, %v412
    %v471 = vpack.c.b16 %v415, %v414
    %v472 = vpack.c.b16 %v417, %v416
    %v473 = vpack.c.b16 %v419, %v418
    %v474 = vpack.c.b16 %v421, %v420
    %v475 = vpack.c.b16 %v423, %v422
    %v476 = vpack.c.b16 %v425, %v424
    %v477 = vpack.c.b16 %v427, %v426
    %v478 = vpack.c.b16 %v429, %v428
    %vm528 = vcmask 130048
    %v530 = vsel %vm528, %v227, 0
    %532 = vmatprep.subr.bf16.mxu0 0
    %533 = vmatpush1.bf16.msra.mxu0 %v430
    %534 = vmatprep.subr.bf16.mxu0 0
    %535 = vmatpush1.bf16.msra.mxu0 %v431
    %536 = vmatprep.subr.bf16.mxu0 0
    %537 = vmatpush1.bf16.msra.mxu0 %v432
    %538 = vmatprep.subr.bf16.mxu0 0
    %539 = vmatpush1.bf16.msra.mxu0 %v433
    %540 = vmatprep.subr.bf16.mxu0 0
    %541 = vmatpush1.bf16.msra.mxu0 %v434
    %542 = vmatprep.subr.bf16.mxu0 0
    %543 = vmatpush1.bf16.msra.mxu0 %v435
    %544 = vmatprep.subr.bf16.mxu0 0
    %545 = vmatpush1.bf16.msra.mxu0 %v436
    %546 = vmatprep.subr.bf16.mxu0 0
    %547 = vmatpush1.bf16.msra.mxu0 %v437
    %548 = vmatprep.subr.bf16.mxu0 0
    %549 = vmatpush1.bf16.msra.mxu0 %v438
    %550 = vmatprep.subr.bf16.mxu0 0
    %551 = vmatpush1.bf16.msra.mxu0 %v439
    %552 = vmatprep.subr.bf16.mxu0 0
    %553 = vmatpush1.bf16.msra.mxu0 %v440
    %554 = vmatprep.subr.bf16.mxu0 0
    %555 = vmatpush1.bf16.msra.mxu0 %v441
    %556 = vmatprep.subr.bf16.mxu0 0
    %557 = vmatpush1.bf16.msra.mxu0 %v442
    %558 = vmatprep.subr.bf16.mxu0 0
    %559 = vmatpush1.bf16.msra.mxu0 %v443
    %560 = vmatprep.subr.bf16.mxu0 0
    %561 = vmatpush1.bf16.msra.mxu0 %v444
    %562 = vmatprep.subr.bf16.mxu0 0
    %563 = vmatpush1.bf16.msra.mxu0 %v445
    %564 = vmatprep.mubr.bf16.mxu0 %v222
    %565 = vmatmul.mubr.bf16.gmra.mrb[0].mxu0 %v221
    %v566 = vpop.f32.mrb[0].mxu0
    %v567 = vadd.f32 %v208, %v566
    %v568 = vpop.f32.mrb[0].mxu0
    %v569 = vpop.f32.mrb[0].mxu0
    %v570 = vpop.f32.mrb[0].mxu0
    %571 = vdwg.mxu0
    %572 = vmatprep.subr.bf16.mxu0 0
    %573 = vmatpush1.bf16.msra.mxu0 %v446
    %574 = vmatprep.subr.bf16.mxu0 0
    %575 = vmatpush1.bf16.msra.mxu0 %v447
    %576 = vmatprep.subr.bf16.mxu0 0
    %577 = vmatpush1.bf16.msra.mxu0 %v448
    %578 = vmatprep.subr.bf16.mxu0 0
    %579 = vmatpush1.bf16.msra.mxu0 %v449
    %580 = vmatprep.subr.bf16.mxu0 0
    %581 = vmatpush1.bf16.msra.mxu0 %v450
    %582 = vmatprep.subr.bf16.mxu0 0
    %583 = vmatpush1.bf16.msra.mxu0 %v451
    %584 = vmatprep.subr.bf16.mxu0 0
    %585 = vmatpush1.bf16.msra.mxu0 %v452
    %586 = vmatprep.subr.bf16.mxu0 0
    %587 = vmatpush1.bf16.msra.mxu0 %v453
    %588 = vmatprep.subr.bf16.mxu0 0
    %589 = vmatpush1.bf16.msra.mxu0 %v454
    %590 = vmatprep.subr.bf16.mxu0 0
    %591 = vmatpush1.bf16.msra.mxu0 %v455
    %592 = vmatprep.subr.bf16.mxu0 0
    %593 = vmatpush1.bf16.msra.mxu0 %v456
    %594 = vmatprep.subr.bf16.mxu0 0
    %595 = vmatpush1.bf16.msra.mxu0 %v457
    %596 = vmatprep.subr.bf16.mxu0 0
    %597 = vmatpush1.bf16.msra.mxu0 %v458
    %598 = vmatprep.subr.bf16.mxu0 0
    %599 = vmatpush1.bf16.msra.mxu0 %v459
    %600 = vmatprep.subr.bf16.mxu0 0
    %601 = vmatpush1.bf16.msra.mxu0 %v460
    %602 = vmatprep.subr.bf16.mxu0 0
    %603 = vmatpush1.bf16.msra.mxu0 %v461
    %604 = vmatprep.mubr.bf16.mxu0 %v224
    %605 = vmatmul.mubr.bf16.gmra.mrb[0].mxu0 %v223
    %v606 = vpop.f32.mrb[0].mxu0
    %v607 = vadd.f32 %v567, %v606
    %v608 = vpop.f32.mrb[0].mxu0
    %v609 = vpop.f32.mrb[0].mxu0
    %v610 = vpop.f32.mrb[0].mxu0
    %611 = vdwg.mxu0
    %612 = vmatprep.subr.bf16.mxu0 0
    %613 = vmatpush1.bf16.msra.mxu0 %v462
    %614 = vmatprep.subr.bf16.mxu0 0
    %615 = vmatpush1.bf16.msra.mxu0 %v463
    %616 = vmatprep.subr.bf16.mxu0 0
    %617 = vmatpush1.bf16.msra.mxu0 %v464
    %618 = vmatprep.subr.bf16.mxu0 0
    %619 = vmatpush1.bf16.msra.mxu0 %v465
    %620 = vmatprep.subr.bf16.mxu0 0
    %621 = vmatpush1.bf16.msra.mxu0 %v466
    %622 = vmatprep.subr.bf16.mxu0 0
    %623 = vmatpush1.bf16.msra.mxu0 %v467
    %624 = vmatprep.subr.bf16.mxu0 0
    %625 = vmatpush1.bf16.msra.mxu0 %v468
    %626 = vmatprep.subr.bf16.mxu0 0
    %627 = vmatpush1.bf16.msra.mxu0 %v469
    %628 = vmatprep.subr.bf16.mxu0 0
    %629 = vmatpush1.bf16.msra.mxu0 %v470
    %630 = vmatprep.subr.bf16.mxu0 0
    %631 = vmatpush1.bf16.msra.mxu0 %v471
    %632 = vmatprep.subr.bf16.mxu0 0
    %633 = vmatpush1.bf16.msra.mxu0 %v472
    %634 = vmatprep.subr.bf16.mxu0 0
    %635 = vmatpush1.bf16.msra.mxu0 %v473
    %636 = vmatprep.subr.bf16.mxu0 0
    %637 = vmatpush1.bf16.msra.mxu0 %v474
    %638 = vmatprep.subr.bf16.mxu0 0
    %639 = vmatpush1.bf16.msra.mxu0 %v475
    %640 = vmatprep.subr.bf16.mxu0 0
    %641 = vmatpush1.bf16.msra.mxu0 %v476
    %642 = vmatprep.subr.bf16.mxu0 0
    %643 = vmatpush1.bf16.msra.mxu0 %v477
    %644 = vmatprep.mubr.bf16.mxu0 %v226
    %645 = vmatmul.mubr.bf16.gmra.mrb[0].mxu0 %v225
    %v646 = vpop.f32.mrb[0].mxu0
    %v647 = vadd.f32 %v607, %v646
    %v648 = vpop.f32.mrb[0].mxu0
    %v649 = vpop.f32.mrb[0].mxu0
    %v650 = vpop.f32.mrb[0].mxu0
    %651 = vdwg.mxu0
    %652 = vmatprep.subr.bf16.mxu0 0
    %653 = vmatpush1.bf16.msra.mxu0 %v478
    %654 = vmatprep.subr.bf16.mxu0 0
    %655 = vmatpush1.bf16.msra.mxu0 0
    %656 = vmatprep.subr.bf16.mxu0 0
    %657 = vmatpush1.bf16.msra.mxu0 0
    %658 = vmatprep.subr.bf16.mxu0 0
    %659 = vmatpush1.bf16.msra.mxu0 0
    %660 = vmatprep.subr.bf16.mxu0 0
    %661 = vmatpush1.bf16.msra.mxu0 0
    %662 = vmatprep.subr.bf16.mxu0 0
    %663 = vmatpush1.bf16.msra.mxu0 0
    %664 = vmatprep.subr.bf16.mxu0 0
    %665 = vmatpush1.bf16.msra.mxu0 0
    %666 = vmatprep.subr.bf16.mxu0 0
    %667 = vmatpush1.bf16.msra.mxu0 0
    %668 = vmatprep.subr.bf16.mxu0 0
    %669 = vmatpush1.bf16.msra.mxu0 0
    %670 = vmatprep.subr.bf16.mxu0 0
    %671 = vmatpush1.bf16.msra.mxu0 0
    %672 = vmatprep.subr.bf16.mxu0 0
    %673 = vmatpush1.bf16.msra.mxu0 0
    %674 = vmatprep.subr.bf16.mxu0 0
    %675 = vmatpush1.bf16.msra.mxu0 0
    %676 = vmatprep.subr.bf16.mxu0 0
    %677 = vmatpush1.bf16.msra.mxu0 0
    %678 = vmatprep.subr.bf16.mxu0 0
    %679 = vmatpush1.bf16.msra.mxu0 0
    %680 = vmatprep.subr.bf16.mxu0 0
    %681 = vmatpush1.bf16.msra.mxu0 0
    %682 = vmatprep.subr.bf16.mxu0 0
    %683 = vmatpush1.bf16.msra.mxu0 0
    %684 = vmatprep.mubr.bf16.mxu0 0
    %685 = vmatmul.mubr.bf16.gmra.mrb[0].mxu0 %v530
    %v686 = vpop.f32.mrb[0].mxu0
    %v687 = vadd.f32 %v647, %v686
    %v688 = vpop.f32.mrb[0].mxu0
    %v689 = vpop.f32.mrb[0].mxu0
    %v690 = vpop.f32.mrb[0].mxu0
    %691 = vdwg.mxu0
    %v692 = vmax.f32 %v687, 0.0
    %v693 = vpack.c.bf16 %v692, %v692
    %v694 = vld [vmem:[%s3] sm:$0xf]
    %v695 = vld [vmem:[%s3 + $0x4] sm:$0xf]
    %v696 = vld [vmem:[%s3 + $0x8] sm:$0xf]
    %v697 = vld [vmem:[%s3 + $0xc] sm:$0xf]
    %v698 = vld [vmem:[%s3 + $0x10] sm:$0xf]
    %v699 = vld [vmem:[%s3 + $0x14] sm:$0xf]
    %v700 = vld [vmem:[%s3 + $0x18] sm:$0xf]
    %v701 = vld [vmem:[%s3 + $0x1c] sm:$0xf]
    %v702 = vld [vmem:[%s3 + $0x20] sm:$0xf]
    %v703 = vld [vmem:[%s3 + $0x24] sm:$0xf]
    %v704 = vld [vmem:[%s3 + $0x28] sm:$0xf]
    %v705 = vld [vmem:[%s3 + $0x2c] sm:$0xf]
    %v706 = vld [vmem:[%s3 + $0x30] sm:$0xf]
    %v707 = vld [vmem:[%s3 + $0x34] sm:$0xf]
    %v708 = vld [vmem:[%s3 + $0x38] sm:$0xf]
    %v709 = vld [vmem:[%s3 + $0x3c] sm:$0xf]
    %v710 = vld [vmem:[#allocation4] sm:$0x1]
    %v712 = vlaneseq
    %v713 = vshrl.u32 %v712, 7
    %v714 = vsub.s32 0, %v713
    %v715 = vrot.slane %v710, %v714
    %v733 = vunpack.c.l.b16 %v694
    %v734 = vunpack.c.l.b16 %v695
    %v735 = vunpack.c.l.b16 %v696
    %v736 = vunpack.c.l.b16 %v697
    %v737 = vunpack.c.l.b16 %v698
    %v738 = vunpack.c.l.b16 %v699
    %v739 = vunpack.c.l.b16 %v700
    %v740 = vunpack.c.l.b16 %v701
    %v741 = vunpack.c.l.b16 %v702
    %v742 = vunpack.c.l.b16 %v703
    %v743 = vunpack.c.l.b16 %v704
    %v744 = vunpack.c.l.b16 %v705
    %v745 = vunpack.c.l.b16 %v706
    %v746 = vunpack.c.l.b16 %v707
    %v747 = vunpack.c.l.b16 %v708
    %v748 = vunpack.c.l.b16 %v709
    %v749 = vpack.c.b16 %v734, %v733
    %v750 = vpack.c.b16 %v736, %v735
    %v751 = vpack.c.b16 %v738, %v737
    %v752 = vpack.c.b16 %v740, %v739
    %v753 = vpack.c.b16 %v742, %v741
    %v754 = vpack.c.b16 %v744, %v743
    %v755 = vpack.c.b16 %v746, %v745
    %v756 = vpack.c.b16 %v748, %v747
    %765 = vmatprep.subr.bf16.mxu0 0
    %766 = vmatpush1.bf16.msra.mxu0 %v749
    %767 = vmatprep.subr.bf16.mxu0 0
    %768 = vmatpush1.bf16.msra.mxu0 %v750
    %769 = vmatprep.subr.bf16.mxu0 0
    %770 = vmatpush1.bf16.msra.mxu0 %v751
    %771 = vmatprep.subr.bf16.mxu0 0
    %772 = vmatpush1.bf16.msra.mxu0 %v752
    %773 = vmatprep.subr.bf16.mxu0 0
    %774 = vmatpush1.bf16.msra.mxu0 %v753
    %775 = vmatprep.subr.bf16.mxu0 0
    %776 = vmatpush1.bf16.msra.mxu0 %v754
    %777 = vmatprep.subr.bf16.mxu0 0
    %778 = vmatpush1.bf16.msra.mxu0 %v755
    %779 = vmatprep.subr.bf16.mxu0 0
    %780 = vmatpush1.bf16.msra.mxu0 %v756
    %781 = vmatprep.subr.bf16.mxu0 0
    %782 = vmatpush1.bf16.msra.mxu0 0
    %783 = vmatprep.subr.bf16.mxu0 0
    %784 = vmatpush1.bf16.msra.mxu0 0
    %785 = vmatprep.subr.bf16.mxu0 0
    %786 = vmatpush1.bf16.msra.mxu0 0
    %787 = vmatprep.subr.bf16.mxu0 0
    %788 = vmatpush1.bf16.msra.mxu0 0
    %789 = vmatprep.subr.bf16.mxu0 0
    %790 = vmatpush1.bf16.msra.mxu0 0
    %791 = vmatprep.subr.bf16.mxu0 0
    %792 = vmatpush1.bf16.msra.mxu0 0
    %793 = vmatprep.subr.bf16.mxu0 0
    %794 = vmatpush1.bf16.msra.mxu0 0
    %795 = vmatprep.subr.bf16.mxu0 0
    %796 = vmatpush1.bf16.msra.mxu0 0
    %797 = vmatprep.mubr.bf16.mxu0 0
    %798 = vmatmul.mubr.bf16.gmra.mrb[0].mxu0 %v693
    %v799 = vpop.f32.mrb[0].mxu0
    %v800 = vadd.f32 %v715, %v799
    %v801 = vpop.f32.mrb[0].mxu0
    %v802 = vpop.f32.mrb[0].mxu0
    %v803 = vpop.f32.mrb[0].mxu0
    %804 = vdwg.mxu0
    %v805 = vmax.f32 %v800, 0.0
    %v806 = vpack.c.bf16 %v805, %v805
    %v807 = vld [vmem:[%s5] sm:$0xf]
    %v808 = vld [vmem:[%s5 + $0x4] sm:$0xf]
    %v809 = vld [vmem:[%s5 + $0x8] sm:$0xf]
    %v810 = vld [vmem:[%s5 + $0xc] sm:$0xf]
    %v811 = vld [vmem:[%s5 + $0x10] sm:$0xf]
    %v812 = vld [vmem:[%s5 + $0x14] sm:$0xf]
    %v813 = vld [vmem:[%s5 + $0x18] sm:$0xf]
    %v814 = vld [vmem:[%s5 + $0x1c] sm:$0xf]
    %v815 = vld [vmem:[%s5 + $0x20] sm:$0xf]
    %v816 = vld [vmem:[%s5 + $0x24] sm:$0xf]
    %v817 = vld [vmem:[%s5 + $0x28] sm:$0xf]
    %v818 = vld [vmem:[%s5 + $0x2c] sm:$0xf]
    %v819 = vld [vmem:[%s5 + $0x30] sm:$0xf]
    %v820 = vld [vmem:[%s5 + $0x34] sm:$0xf]
    %v821 = vld [vmem:[%s5 + $0x38] sm:$0xf]
    %v822 = vld [vmem:[%s5 + $0x3c] sm:$0xf]
    %v823 = vld [vmem:[#allocation6] sm:$0x1]
    %v825 = vlaneseq
    %v826 = vshrl.u32 %v825, 7
    %v827 = vsub.s32 0, %v826
    %v828 = vrot.slane %v823, %v827
    %v846 = vunpack.c.l.b16 %v807
    %v847 = vunpack.c.l.b16 %v808
    %v848 = vunpack.c.l.b16 %v809
    %v849 = vunpack.c.l.b16 %v810
    %v850 = vunpack.c.l.b16 %v811
    %v851 = vunpack.c.l.b16 %v812
    %v852 = vunpack.c.l.b16 %v813
    %v853 = vunpack.c.l.b16 %v814
    %v854 = vunpack.c.l.b16 %v815
    %v855 = vunpack.c.l.b16 %v816
    %v856 = vunpack.c.l.b16 %v817
    %v857 = vunpack.c.l.b16 %v818
    %v858 = vunpack.c.l.b16 %v819
    %v859 = vunpack.c.l.b16 %v820
    %v860 = vunpack.c.l.b16 %v821
    %v861 = vunpack.c.l.b16 %v822
    %v862 = vpack.c.b16 %v847, %v846
    %v863 = vpack.c.b16 %v849, %v848
    %v864 = vpack.c.b16 %v851, %v850
    %v865 = vpack.c.b16 %v853, %v852
    %v866 = vpack.c.b16 %v855, %v854
    %v867 = vpack.c.b16 %v857, %v856
    %v868 = vpack.c.b16 %v859, %v858
    %v869 = vpack.c.b16 %v861, %v860
    %878 = vmatprep.subr.bf16.mxu0 0
    %879 = vmatpush1.bf16.msra.mxu0 %v862
    %880 = vmatprep.subr.bf16.mxu0 0
    %881 = vmatpush1.bf16.msra.mxu0 %v863
    %882 = vmatprep.subr.bf16.mxu0 0
    %883 = vmatpush1.bf16.msra.mxu0 %v864
    %884 = vmatprep.subr.bf16.mxu0 0
    %885 = vmatpush1.bf16.msra.mxu0 %v865
    %886 = vmatprep.subr.bf16.mxu0 0
    %887 = vmatpush1.bf16.msra.mxu0 %v866
    %888 = vmatprep.subr.bf16.mxu0 0
    %889 = vmatpush1.bf16.msra.mxu0 %v867
    %890 = vmatprep.subr.bf16.mxu0 0
    %891 = vmatpush1.bf16.msra.mxu0 %v868
    %892 = vmatprep.subr.bf16.mxu0 0
    %893 = vmatpush1.bf16.msra.mxu0 %v869
    %894 = vmatprep.subr.bf16.mxu0 0
    %895 = vmatpush1.bf16.msra.mxu0 0
    %896 = vmatprep.subr.bf16.mxu0 0
    %897 = vmatpush1.bf16.msra.mxu0 0
    %898 = vmatprep.subr.bf16.mxu0 0
    %899 = vmatpush1.bf16.msra.mxu0 0
    %900 = vmatprep.subr.bf16.mxu0 0
    %901 = vmatpush1.bf16.msra.mxu0 0
    %902 = vmatprep.subr.bf16.mxu0 0
    %903 = vmatpush1.bf16.msra.mxu0 0
    %904 = vmatprep.subr.bf16.mxu0 0
    %905 = vmatpush1.bf16.msra.mxu0 0
    %906 = vmatprep.subr.bf16.mxu0 0
    %907 = vmatpush1.bf16.msra.mxu0 0
    %908 = vmatprep.subr.bf16.mxu0 0
    %909 = vmatpush1.bf16.msra.mxu0 0
    %910 = vmatprep.mubr.bf16.mxu0 0
    %911 = vmatmul.mubr.bf16.gmra.mrb[0].mxu0 %v806
    %v912 = vpop.f32.mrb[0].mxu0
    %v913 = vadd.f32 %v828, %v912
    %v914 = vpop.f32.mrb[0].mxu0
    %v915 = vpop.f32.mrb[0].mxu0
    %v916 = vpop.f32.mrb[0].mxu0
    %917 = vdwg.mxu0
    %v918 = vmax.f32 %v913, 0.0
    %v919 = vpack.c.bf16 %v918, %v918
    %v920 = vld [vmem:[#allocation7] sm:$0xf]
    %v921 = vld [vmem:[#allocation7 + $0x4] sm:$0xf]
    %v922 = vld [vmem:[#allocation7 + $0x8] sm:$0xf]
    %v923 = vld [vmem:[#allocation7 + $0xc] sm:$0xf]
    %v924 = vld [vmem:[#allocation7 + $0x10] sm:$0xf]
    %v925 = vld [vmem:[#allocation7 + $0x14] sm:$0xf]
    %v926 = vld [vmem:[#allocation7 + $0x18] sm:$0xf]
    %v927 = vld [vmem:[#allocation7 + $0x1c] sm:$0xf]
    %v928 = vld [vmem:[#allocation7 + $0x20] sm:$0xf]
    %v929 = vld [vmem:[#allocation7 + $0x24] sm:$0xf]
    %v930 = vld [vmem:[#allocation7 + $0x28] sm:$0xf]
    %v931 = vld [vmem:[#allocation7 + $0x2c] sm:$0xf]
    %v932 = vld [vmem:[#allocation7 + $0x30] sm:$0xf]
    %v933 = vld [vmem:[#allocation7 + $0x34] sm:$0xf]
    %v934 = vld [vmem:[#allocation7 + $0x38] sm:$0xf]
    %v935 = vld [vmem:[#allocation7 + $0x3c] sm:$0xf]
    %v936 = vld [vmem:[#allocation9] sm:$0x1]
    %v938 = vlaneseq
    %v939 = vshrl.u32 %v938, 7
    %v940 = vsub.s32 0, %v939
    %v941 = vrot.slane %v936, %v940
    %v959 = vunpack.c.l.b16 %v920
    %v960 = vunpack.c.l.b16 %v921
    %v961 = vunpack.c.l.b16 %v922
    %v962 = vunpack.c.l.b16 %v923
    %v963 = vunpack.c.l.b16 %v924
    %v964 = vunpack.c.l.b16 %v925
    %v965 = vunpack.c.l.b16 %v926
    %v966 = vunpack.c.l.b16 %v927
    %v967 = vunpack.c.l.b16 %v928
    %v968 = vunpack.c.l.b16 %v929
    %v969 = vunpack.c.l.b16 %v930
    %v970 = vunpack.c.l.b16 %v931
    %v971 = vunpack.c.l.b16 %v932
    %v972 = vunpack.c.l.b16 %v933
    %v973 = vunpack.c.l.b16 %v934
    %v974 = vunpack.c.l.b16 %v935
    %v975 = vpack.c.b16 %v960, %v959
    %v976 = vpack.c.b16 %v962, %v961
    %v977 = vpack.c.b16 %v964, %v963
    %v978 = vpack.c.b16 %v966, %v965
    %v979 = vpack.c.b16 %v968, %v967
    %v980 = vpack.c.b16 %v970, %v969
    %v981 = vpack.c.b16 %v972, %v971
    %v982 = vpack.c.b16 %v974, %v973
    %991 = vmatprep.subr.bf16.mxu0 0
    %992 = vmatpush1.bf16.msra.mxu0 %v975
    %993 = vmatprep.subr.bf16.mxu0 0
    %994 = vmatpush1.bf16.msra.mxu0 %v976
    %995 = vmatprep.subr.bf16.mxu0 0
    %996 = vmatpush1.bf16.msra.mxu0 %v977
    %997 = vmatprep.subr.bf16.mxu0 0
    %998 = vmatpush1.bf16.msra.mxu0 %v978
    %999 = vmatprep.subr.bf16.mxu0 0
    %1000 = vmatpush1.bf16.msra.mxu0 %v979
    %1001 = vmatprep.subr.bf16.mxu0 0
    %1002 = vmatpush1.bf16.msra.mxu0 %v980
    %1003 = vmatprep.subr.bf16.mxu0 0
    %1004 = vmatpush1.bf16.msra.mxu0 %v981
    %1005 = vmatprep.subr.bf16.mxu0 0
    %1006 = vmatpush1.bf16.msra.mxu0 %v982
    %1007 = vmatprep.subr.bf16.mxu0 0
    %1008 = vmatpush1.bf16.msra.mxu0 0
    %1009 = vmatprep.subr.bf16.mxu0 0
    %1010 = vmatpush1.bf16.msra.mxu0 0
    %1011 = vmatprep.subr.bf16.mxu0 0
    %1012 = vmatpush1.bf16.msra.mxu0 0
    %1013 = vmatprep.subr.bf16.mxu0 0
    %1014 = vmatpush1.bf16.msra.mxu0 0
    %1015 = vmatprep.subr.bf16.mxu0 0
    %1016 = vmatpush1.bf16.msra.mxu0 0
    %1017 = vmatprep.subr.bf16.mxu0 0
    %1018 = vmatpush1.bf16.msra.mxu0 0
    %1019 = vmatprep.subr.bf16.mxu0 0
    %1020 = vmatpush1.bf16.msra.mxu0 0
    %1021 = vmatprep.subr.bf16.mxu0 0
    %1022 = vmatpush1.bf16.msra.mxu0 0
    %1023 = vmatprep.mubr.bf16.mxu0 0
    %1024 = vmatmul.mubr.bf16.gmra.mrb[0].mxu0 %v919
    %v1025 = vpop.f32.mrb[0].mxu0
    %v1026 = vadd.f32 %v941, %v1025
    %v1027 = vpop.f32.mrb[0].mxu0
    %v1028 = vpop.f32.mrb[0].mxu0
    %v1029 = vpop.f32.mrb[0].mxu0
    %1030 = vdwg.mxu0
    %v1031 = vmax.f32 %v1026, 0.0
    %v1032 = vpack.c.bf16 %v1031, %v1031
    %v1033 = vld [vmem:[%s9] sm:$0xf]
    %v1034 = vld [vmem:[%s9 + $0x4] sm:$0xf]
    %v1035 = vld [vmem:[%s9 + $0x8] sm:$0xf]
    %v1036 = vld [vmem:[%s9 + $0xc] sm:$0xf]
    %v1037 = vld [vmem:[%s9 + $0x10] sm:$0xf]
    %v1038 = vld [vmem:[%s9 + $0x14] sm:$0xf]
    %v1039 = vld [vmem:[%s9 + $0x18] sm:$0xf]
    %v1040 = vld [vmem:[%s9 + $0x1c] sm:$0xf]
    %v1041 = vld [vmem:[%s9 + $0x20] sm:$0xf]
    %v1042 = vld [vmem:[%s9 + $0x24] sm:$0xf]
    %v1043 = vld [vmem:[%s9 + $0x28] sm:$0xf]
    %v1044 = vld [vmem:[%s9 + $0x2c] sm:$0xf]
    %v1045 = vld [vmem:[%s9 + $0x30] sm:$0xf]
    %v1046 = vld [vmem:[%s9 + $0x34] sm:$0xf]
    %v1047 = vld [vmem:[%s9 + $0x38] sm:$0xf]
    %v1048 = vld [vmem:[%s9 + $0x3c] sm:$0xf]
    %v1049 = vld [vmem:[%s10] sm:$0x1]
    %v1051 = vlaneseq
    %v1052 = vshrl.u32 %v1051, 7
    %v1053 = vsub.s32 0, %v1052
    %v1054 = vrot.slane %v1049, %v1053
    %v1072 = vunpack.c.l.b16 %v1033
    %v1073 = vunpack.c.l.b16 %v1034
    %v1074 = vunpack.c.l.b16 %v1035
    %v1075 = vunpack.c.l.b16 %v1036
    %v1076 = vunpack.c.l.b16 %v1037
    %v1077 = vunpack.c.l.b16 %v1038
    %v1078 = vunpack.c.l.b16 %v1039
    %v1079 = vunpack.c.l.b16 %v1040
    %v1080 = vunpack.c.l.b16 %v1041
    %v1081 = vunpack.c.l.b16 %v1042
    %v1082 = vunpack.c.l.b16 %v1043
    %v1083 = vunpack.c.l.b16 %v1044
    %v1084 = vunpack.c.l.b16 %v1045
    %v1085 = vunpack.c.l.b16 %v1046
    %v1086 = vunpack.c.l.b16 %v1047
    %v1087 = vunpack.c.l.b16 %v1048
    %v1088 = vpack.c.b16 %v1073, %v1072
    %v1089 = vpack.c.b16 %v1075, %v1074
    %v1090 = vpack.c.b16 %v1077, %v1076
    %v1091 = vpack.c.b16 %v1079, %v1078
    %v1092 = vpack.c.b16 %v1081, %v1080
    %v1093 = vpack.c.b16 %v1083, %v1082
    %v1094 = vpack.c.b16 %v1085, %v1084
    %v1095 = vpack.c.b16 %v1087, %v1086
    %1104 = vmatprep.subr.bf16.mxu0 0
    %1105 = vmatpush1.bf16.msra.mxu0 %v1088
    %1106 = vmatprep.subr.bf16.mxu0 0
    %1107 = vmatpush1.bf16.msra.mxu0 %v1089
    %1108 = vmatprep.subr.bf16.mxu0 0
    %1109 = vmatpush1.bf16.msra.mxu0 %v1090
    %1110 = vmatprep.subr.bf16.mxu0 0
    %1111 = vmatpush1.bf16.msra.mxu0 %v1091
    %1112 = vmatprep.subr.bf16.mxu0 0
    %1113 = vmatpush1.bf16.msra.mxu0 %v1092
    %1114 = vmatprep.subr.bf16.mxu0 0
    %1115 = vmatpush1.bf16.msra.mxu0 %v1093
    %1116 = vmatprep.subr.bf16.mxu0 0
    %1117 = vmatpush1.bf16.msra.mxu0 %v1094
    %1118 = vmatprep.subr.bf16.mxu0 0
    %1119 = vmatpush1.bf16.msra.mxu0 %v1095
    %1120 = vmatprep.subr.bf16.mxu0 0
    %1121 = vmatpush1.bf16.msra.mxu0 0
    %1122 = vmatprep.subr.bf16.mxu0 0
    %1123 = vmatpush1.bf16.msra.mxu0 0
    %1124 = vmatprep.subr.bf16.mxu0 0
    %1125 = vmatpush1.bf16.msra.mxu0 0
    %1126 = vmatprep.subr.bf16.mxu0 0
    %1127 = vmatpush1.bf16.msra.mxu0 0
    %1128 = vmatprep.subr.bf16.mxu0 0
    %1129 = vmatpush1.bf16.msra.mxu0 0
    %1130 = vmatprep.subr.bf16.mxu0 0
    %1131 = vmatpush1.bf16.msra.mxu0 0
    %1132 = vmatprep.subr.bf16.mxu0 0
    %1133 = vmatpush1.bf16.msra.mxu0 0
    %1134 = vmatprep.subr.bf16.mxu0 0
    %1135 = vmatpush1.bf16.msra.mxu0 0
    %1136 = vmatprep.mubr.bf16.mxu0 0
    %1137 = vmatmul.mubr.bf16.gmra.mrb[0].mxu0 %v1032
    %v1138 = vpop.f32.mrb[0].mxu0
    %v1139 = vadd.f32 %v1054, %v1138
    %v1140 = vpop.f32.mrb[0].mxu0
    %v1141 = vpop.f32.mrb[0].mxu0
    %v1142 = vpop.f32.mrb[0].mxu0
    %1143 = vdwg.mxu0
    %v1144 = vlaneseq
    %v1145 = vand.u32 %v1144, 127
    %vm1146 = vcmp.lt.s32.totalorder %v1145, 10
    %v1147 = vsel %vm1146, %v1139, -inf
    %1148 = vmax.xlane.f32.xlu0 %v1147
    %v1149 = vpop.xlane.xlu0 %1148
    %v1150 = vsub.f32 %v1147, %v1149
    %v1151 = vmul.f32 %v1150, 1.442695
    %v1152 = vpow.pop %v1151
    %v1153 = vsel %vm1146, %v1152, 0.0
    %1154 = vadd.xlane.f32.xlu0 %v1153
    %v1155 = vpop.xlane.xlu0 %1154
    %v1156 = vrcp.pop %v1155
    %v1157 = vmul.f32 %v1153, %v1156
    %1158 = vst [vmem:[%s11] sm:$0xff] %v1157
    // Predicated region
    $region66: #{custom_mlp_forward.1} parent=1 // pred_check
      _
    $region67: #{custom_mlp_forward.1} parent=1 // pred_check_branch
      %1160 = sbr.rel (0) target = $region69
    $region68: #{custom_mlp_forward.1} parent=1 // pred_region
      _
    $region69: #{custom_mlp_forward.1} parent=1 // pred_fallthru
      _
    // Predicated region
    $region70: #{custom_mlp_forward.1} parent=1 // pred_check
      _
    $region71: #{custom_mlp_forward.1} parent=1 // pred_check_branch
      %1162 = sbr.rel (0) target = $region73
    $region72: #{custom_mlp_forward.1} parent=1 // pred_region
      _
    $region73: #{custom_mlp_forward.1} parent=1 // pred_fallthru
      _
    %1163 = vsyncpa [#allocation3], 1
    %1164 = vsyncpa [#allocation5], 1
    %1165 = vsyncpa [#allocation8], 1

</llo_original>
